<compile_context>
chip_gen: v6e
topology: v6e:2x2x1
jax: 0.10.0
libtpu: 0.0.40
codegen_flags: <defaults>
</compile_context>

<pallas_src>
import jax
import jax.numpy as jnp
from jax import lax
from jax.experimental import pallas as pl
from jax.experimental.pallas import tpu as pltpu


def mlp_kernel(x_ref, w1_ref, b1_ref, w2_ref, b2_ref, w3_ref, b3_ref, ot_ref):
    x = x_ref[...]                                                     # (TILE_B, n_in)

    # fc1: contract over x's last axis -> lane-dense (n_hidden, TILE_B), no transpose.
    h1 = lax.dot_general(w1_ref[...], x,
                         dimension_numbers=(((1,), (1,)), ((), ())),
                         preferred_element_type=jnp.float32) + b1_ref[...]
    h1 = jnp.maximum(h1, 0.0)                                          # relu (VPU)

    # fc2: MXU matmul in transposed layout -> (n_hidden, TILE_B).
    h2 = jnp.dot(w2_ref[...], h1, preferred_element_type=jnp.float32) + b2_ref[...]
    h2 = jnp.maximum(h2, 0.0)                                          # relu (VPU)

    # fc3 (n_hidden -> 1): VPU broadcast-multiply + sublane (XLU) reduce,
    # producing a lane-dense (1, TILE_B) row.
    out = jnp.sum(h2 * w3_ref[...], axis=0, keepdims=True) + b3_ref[...]
    ot_ref[...] = out.astype(ot_ref.dtype)


def _pick_tile_b(B):
    """Large tiles to amortize the ~600-cycle per-step overhead, while keeping
    >= ~4 grid steps when B is large (v7x dual-TC + DMA/compute overlap)."""
    if B <= 512:
        return B                                # single block (block == full dim)
    tile = (B // 4) // 128 * 128                # aim for >= 4 steps
    tile = max(512, min(4096, tile))            # but keep tiles big, multiple of 128
    return tile


def minimal_mlp(x, w1, b1, w2, b2, w3, b3, *, tile_b=None):
    """x: (B, n_input) f32.  Returns (B, 1) f32, matching the PyTorch module."""
    B, n_in = x.shape
    n_hidden = w1.shape[0]

    TILE_B = _pick_tile_b(B) if tile_b is None else min(tile_b, B)
    if TILE_B < B and TILE_B % 128 != 0:
        TILE_B = max(128, TILE_B // 128 * 128)  # lane-width multiple when tiling

    grid = (pl.cdiv(B, TILE_B),)

    resident = lambda a: pl.BlockSpec(a.shape, lambda i: (0, 0))  # stays in VMEM

    out_t = pl.pallas_call(
        mlp_kernel,
        out_shape=jax.ShapeDtypeStruct((1, B), jnp.float32),
        grid=grid,
        in_specs=[
            pl.BlockSpec((TILE_B, n_in), lambda i: (i, 0)),   # x tile, natural layout
            resident(w1), resident(b1),
            resident(w2), resident(b2),
            resident(w3), resident(b3),
        ],
        out_specs=pl.BlockSpec((1, TILE_B), lambda i: (0, i)),  # lane-dense output row
        compiler_params=pltpu.CompilerParams(
            dimension_semantics=("parallel",)),                 # megacore on v7x
    )(x, w1, b1, w2, b2, w3, b3)

    return out_t.T                                              # (B, 1) like nn.Linear


def init_params(key, n_input=8, n_hidden=16):
    # Deterministic init mimicking PyTorch's default Linear init:
    # U(-1/sqrt(fan_in), 1/sqrt(fan_in)) for both weight and bias.
    def linear(k, fan_in, fan_out):
        kw, kb = jax.random.split(k)
        bound = 1.0 / jnp.sqrt(jnp.float32(fan_in))
        w = jax.random.uniform(kw, (fan_out, fan_in), jnp.float32, -bound, bound)
        b = jax.random.uniform(kb, (fan_out, 1), jnp.float32, -bound, bound)
        return w, b

    k1, k2, k3 = jax.random.split(key, 3)
    w1, b1 = linear(k1, n_input, n_hidden)    # (16, 8),  (16, 1)
    w2, b2 = linear(k2, n_hidden, n_hidden)   # (16, 16), (16, 1)
    w3t, b3 = linear(k3, n_hidden, 1)         # (1, 16),  (1, 1)
    w3 = w3t.T                                # (16, 1) column for the VPU reduction
    return w1, b1, w2, b2, w3, b3


if __name__ == "__main__":
    key = jax.random.PRNGKey(0)
    k_params, k_x, k_x2 = jax.random.split(key, 3)

    n_input, n_hidden = 8, 16
    params = init_params(k_params, n_input, n_hidden)
    w1, b1, w2, b2, w3, b3 = params

    def ref_mlp(x):
        h = jnp.maximum(x @ w1.T + b1.T, 0.0)
        h = jnp.maximum(h @ w2.T + b2.T, 0.0)
        return h @ w3 + b3

    # Small case (single block, TILE_B == B): boolean-concept style 0/1 inputs.
    x_small = jax.random.bernoulli(k_x, 0.5, (8, n_input)).astype(jnp.float32)
    out_small = minimal_mlp(x_small, *params)
    jax.block_until_ready(out_small)
    assert out_small.shape == (8, 1)
    assert jnp.allclose(out_small, ref_mlp(x_small), atol=1e-5, rtol=1e-5)

    # Larger case exercising the batch grid, resident weights across steps,
    # and a ragged (masked) last tile: B=1280 -> TILE_B=512, grid=3.
    x_big = jax.random.bernoulli(k_x2, 0.5, (1280, n_input)).astype(jnp.float32)
    out_big = minimal_mlp(x_big, *params)
    jax.block_until_ready(out_big)
    assert out_big.shape == (1280, 1)
    assert jnp.allclose(out_big, ref_mlp(x_big), atol=1e-5, rtol=1e-5)

    print("KERNEL_OK")
</pallas_src>

<mosaic_0001>
module attributes {stable_mosaic.version = 11 : i64} {
  func.func @mlp_kernel(%arg0: i32, %arg1: memref<8x8xf32, #tpu.memory_space<vmem>>, %arg2: memref<16x8xf32, #tpu.memory_space<vmem>>, %arg3: memref<16x1xf32, #tpu.memory_space<vmem>>, %arg4: memref<16x16xf32, #tpu.memory_space<vmem>>, %arg5: memref<16x1xf32, #tpu.memory_space<vmem>>, %arg6: memref<16x1xf32, #tpu.memory_space<vmem>>, %arg7: memref<1x1xf32, #tpu.memory_space<vmem>>, %arg8: memref<1x8xf32, #tpu.memory_space<vmem>>) attributes {dimension_semantics = [#tpu.dimension_semantics<parallel>], iteration_bounds = array<i64: 1>, scalar_prefetch = 0 : i64, scratch_operands = 0 : i64, tpu.core_type = #tpu.core_type<tc>, window_params = [{transform_indices = @transform_0, window_bounds = array<i64: 8, 8>}, {pipeline_mode = #tpu.pipeline_mode<synchronous>, transform_indices = @transform_1, window_bounds = array<i64: 16, 8>}, {pipeline_mode = #tpu.pipeline_mode<synchronous>, transform_indices = @transform_2, window_bounds = array<i64: 16, 1>}, {pipeline_mode = #tpu.pipeline_mode<synchronous>, transform_indices = @transform_3, window_bounds = array<i64: 16, 16>}, {pipeline_mode = #tpu.pipeline_mode<synchronous>, transform_indices = @transform_4, window_bounds = array<i64: 16, 1>}, {pipeline_mode = #tpu.pipeline_mode<synchronous>, transform_indices = @transform_5, window_bounds = array<i64: 16, 1>}, {pipeline_mode = #tpu.pipeline_mode<synchronous>, transform_indices = @transform_6, window_bounds = array<i64: 1, 1>}, {transform_indices = @transform_7, window_bounds = array<i64: 1, 8>}]} {
    %c0 = arith.constant 0 : index
    %c0_0 = arith.constant 0 : index
    %0 = vector.load %arg1[%c0, %c0_0] : memref<8x8xf32, #tpu.memory_space<vmem>>, vector<8x8xf32>
    %c0_1 = arith.constant 0 : index
    %c0_2 = arith.constant 0 : index
    %1 = vector.load %arg2[%c0_1, %c0_2] : memref<16x8xf32, #tpu.memory_space<vmem>>, vector<16x8xf32>
    %cst = arith.constant dense<0.000000e+00> : vector<16x8xf32>
    %2 = tpu.matmul %1, %0, %cst {dimension_numbers = #tpu.dot_dimension_numbers<[1], [1], [0], [0], [0, 0, 1, 0], [], []>} : vector<16x8xf32>, vector<8x8xf32>, vector<16x8xf32> -> vector<16x8xf32>
    %c0_3 = arith.constant 0 : index
    %c0_4 = arith.constant 0 : index
    %3 = vector.load %arg3[%c0_3, %c0_4] : memref<16x1xf32, #tpu.memory_space<vmem>>, vector<16x1xf32>
    %4 = vector.broadcast %3 : vector<16x1xf32> to vector<16x8xf32>
    %5 = arith.addf %2, %4 : vector<16x8xf32>
    %cst_5 = arith.constant 0.000000e+00 : f32
    %6 = vector.broadcast %cst_5 : f32 to vector<16x8xf32>
    %7 = arith.maximumf %5, %6 : vector<16x8xf32>
    %c0_6 = arith.constant 0 : index
    %c0_7 = arith.constant 0 : index
    %8 = vector.load %arg4[%c0_6, %c0_7] : memref<16x16xf32, #tpu.memory_space<vmem>>, vector<16x16xf32>
    %cst_8 = arith.constant dense<0.000000e+00> : vector<16x8xf32>
    %9 = tpu.matmul %8, %7, %cst_8 {dimension_numbers = #tpu.dot_dimension_numbers<[1], [0], [0], [1], [0, 0, 1, 1], [], []>} : vector<16x16xf32>, vector<16x8xf32>, vector<16x8xf32> -> vector<16x8xf32>
    %c0_9 = arith.constant 0 : index
    %c0_10 = arith.constant 0 : index
    %10 = vector.load %arg5[%c0_9, %c0_10] : memref<16x1xf32, #tpu.memory_space<vmem>>, vector<16x1xf32>
    %11 = vector.broadcast %10 : vector<16x1xf32> to vector<16x8xf32>
    %12 = arith.addf %9, %11 : vector<16x8xf32>
    %cst_11 = arith.constant 0.000000e+00 : f32
    %13 = vector.broadcast %cst_11 : f32 to vector<16x8xf32>
    %14 = arith.maximumf %12, %13 : vector<16x8xf32>
    %c0_12 = arith.constant 0 : index
    %c0_13 = arith.constant 0 : index
    %15 = vector.load %arg6[%c0_12, %c0_13] : memref<16x1xf32, #tpu.memory_space<vmem>>, vector<16x1xf32>
    %16 = vector.broadcast %15 : vector<16x1xf32> to vector<16x8xf32>
    %17 = arith.mulf %14, %16 : vector<16x8xf32>
    %cst_14 = arith.constant dense<0.000000e+00> : vector<8xf32>
    %18 = vector.multi_reduction <add>, %17, %cst_14 [0] : vector<16x8xf32> to vector<8xf32>
    %19 = vector.shape_cast %18 : vector<8xf32> to vector<1x8xf32>
    %c0_15 = arith.constant 0 : index
    %c0_16 = arith.constant 0 : index
    %20 = vector.load %arg7[%c0_15, %c0_16] : memref<1x1xf32, #tpu.memory_space<vmem>>, vector<1x1xf32>
    %21 = vector.broadcast %20 : vector<1x1xf32> to vector<1x8xf32>
    %22 = arith.addf %19, %21 : vector<1x8xf32>
    %c0_17 = arith.constant 0 : index
    %c0_18 = arith.constant 0 : index
    %23 = vector.load %arg8[%c0_17, %c0_18] : memref<1x8xf32, #tpu.memory_space<vmem>>, vector<1x8xf32>
    tpu.vector_store %arg8[%c0_17, %c0_18], %22 {strides = array<i32>} : memref<1x8xf32, #tpu.memory_space<vmem>>, vector<1x8xf32>,
    return
  }
  func.func @transform_0(%arg0: i32) -> (i32, i32) {
    %c0_i32 = arith.constant 0 : i32
    %c0_i32_0 = arith.constant 0 : i32
    return %arg0, %c0_i32 : i32, i32
  }
  func.func @transform_1(%arg0: i32) -> (i32, i32) {
    %c0_i32 = arith.constant 0 : i32
    %c0_i32_0 = arith.constant 0 : i32
    %c0_i32_1 = arith.constant 0 : i32
    return %c0_i32, %c0_i32_0 : i32, i32
  }
  func.func @transform_2(%arg0: i32) -> (i32, i32) {
    %c0_i32 = arith.constant 0 : i32
    %c0_i32_0 = arith.constant 0 : i32
    %c0_i32_1 = arith.constant 0 : i32
    return %c0_i32, %c0_i32_0 : i32, i32
  }
  func.func @transform_3(%arg0: i32) -> (i32, i32) {
    %c0_i32 = arith.constant 0 : i32
    %c0_i32_0 = arith.constant 0 : i32
    %c0_i32_1 = arith.constant 0 : i32
    return %c0_i32, %c0_i32_0 : i32, i32
  }
  func.func @transform_4(%arg0: i32) -> (i32, i32) {
    %c0_i32 = arith.constant 0 : i32
    %c0_i32_0 = arith.constant 0 : i32
    %c0_i32_1 = arith.constant 0 : i32
    return %c0_i32, %c0_i32_0 : i32, i32
  }
  func.func @transform_5(%arg0: i32) -> (i32, i32) {
    %c0_i32 = arith.constant 0 : i32
    %c0_i32_0 = arith.constant 0 : i32
    %c0_i32_1 = arith.constant 0 : i32
    return %c0_i32, %c0_i32_0 : i32, i32
  }
  func.func @transform_6(%arg0: i32) -> (i32, i32) {
    %c0_i32 = arith.constant 0 : i32
    %c0_i32_0 = arith.constant 0 : i32
    %c0_i32_1 = arith.constant 0 : i32
    return %c0_i32, %c0_i32_0 : i32, i32
  }
  func.func @transform_7(%arg0: i32) -> (i32, i32) {
    %c0_i32 = arith.constant 0 : i32
    %c0_i32_0 = arith.constant 0 : i32
    return %c0_i32, %arg0 : i32, i32
  }
}

</mosaic_0001>

<llo_original>
// kernel: tpu_custom_call.1
$region0: #{tpu_custom_call.1}
  #allocation0 [shape = 'u32[]', space=smem, size = 0x4, offset = 0x4, fixed_abs, tag = 'smem constant byte address 0x4 - core index']
  #allocation1 [shape = 'u32[144,128]{1,0:T(1,128)}', space=vmem, size = 0x12000, scoped, tag = 'internal scratch']
  #allocation2 [shape = 'f32[1,1]{1,0:T(1,128)S(1)}', space=vmem, size = 0x200, scoped, tag = 'scoped memory for tpu_custom_call.1']
  %s0 = inlined_call_operand.vmem [shape: f32[8,8], index: 0, kind: input, shape index: {}]
  %s1 = inlined_call_operand.vmem [shape: f32[16,8], index: 1, kind: input, shape index: {}]
  %s2 = inlined_call_operand.vmem [shape: f32[16,1], index: 2, kind: input, shape index: {}]
  %s3 = inlined_call_operand.vmem [shape: f32[16,16], index: 3, kind: input, shape index: {}]
  %s4 = inlined_call_operand.vmem [shape: f32[16,1], index: 4, kind: input, shape index: {}]
  %s5 = inlined_call_operand.vmem [shape: f32[16,1], index: 5, kind: input, shape index: {}]
  %s6 = inlined_call_operand.<no memory space> [shape: f32[1,1], index: 6, kind: input, shape index: {}]
  %s7 = inlined_call_operand.hbm [shape: f32[1,8], index: 7, kind: output, shape index: {}]
  %s8 = sld [smem:[#allocation0]]
  $region38: #{tpu_custom_call.1} parent=0
    _
  %s10 = ssub.s32 1, %s8
  %s11 = scalar_select 0, %s10, %s8
  %v12 = vstv %s6
  %13 = vst [vmem:[#allocation2] sm:$0x1] %v12
  $region1: #{tpu_custom_call.1} parent=0
    #allocation3 [shape = 'u8[512]{0}', space=vmem, size = 0x400, scoped, tag = 'output window, operand 0, single buffered']
    #allocation4 [shape = 's32[1]{0}', space=sflag, size = 0x4, scoped, tag = 'scoped memory for tpu_custom_call.1']
    %14 = vsyncpa [#allocation4], 0
    // Predicated region
    $region2: #{tpu_custom_call.1} parent=1 // pred_check
      _
    $region3: #{tpu_custom_call.1} parent=1 // pred_check_branch
      %16 = sbr.rel (0) target = $region5
    $region4: #{tpu_custom_call.1} parent=1 // pred_region
      _
    $region5: #{tpu_custom_call.1} parent=1 // pred_fallthru
      _
    // Predicated region
    $region6: #{tpu_custom_call.1} parent=1 // pred_check
      _
    $region7: #{tpu_custom_call.1} parent=1 // pred_check_branch
      %18 = sbr.rel (0) target = $region9
    $region8: #{tpu_custom_call.1} parent=1 // pred_region
      _
    $region9: #{tpu_custom_call.1} parent=1 // pred_fallthru
      _
    // Predicated region
    $region10: #{tpu_custom_call.1} parent=1 // pred_check
      _
    $region11: #{tpu_custom_call.1} parent=1 // pred_check_branch
      %20 = sbr.rel (0) target = $region13
    $region12: #{tpu_custom_call.1} parent=1 // pred_region
      _
    $region13: #{tpu_custom_call.1} parent=1 // pred_fallthru
      _
    // Predicated region
    $region14: #{tpu_custom_call.1} parent=1 // pred_check
      _
    $region15: #{tpu_custom_call.1} parent=1 // pred_check_branch
      %22 = sbr.rel (0) target = $region17
    $region16: #{tpu_custom_call.1} parent=1 // pred_region
      _
    $region17: #{tpu_custom_call.1} parent=1 // pred_fallthru
      _
    // Predicated region
    $region18: #{tpu_custom_call.1} parent=1 // pred_check
      _
    $region19: #{tpu_custom_call.1} parent=1 // pred_check_branch
      %24 = sbr.rel (0) target = $region21
    $region20: #{tpu_custom_call.1} parent=1 // pred_region
      _
    $region21: #{tpu_custom_call.1} parent=1 // pred_fallthru
      _
    // Predicated region
    $region22: #{tpu_custom_call.1} parent=1 // pred_check
      _
    $region23: #{tpu_custom_call.1} parent=1 // pred_check_branch
      %26 = sbr.rel (0) target = $region25
    $region24: #{tpu_custom_call.1} parent=1 // pred_region
      _
    $region25: #{tpu_custom_call.1} parent=1 // pred_fallthru
      _
    // Predicated region
    $region26: #{tpu_custom_call.1} parent=1 // pred_check
      _
    $region27: #{tpu_custom_call.1} parent=1 // pred_check_branch
      %28 = sbr.rel (0) target = $region29
    $region28: #{tpu_custom_call.1} parent=1 // pred_region
      _
    $region29: #{tpu_custom_call.1} parent=1 // pred_fallthru
      _
    %v29 = vld [vmem:[%s0] sm:$0xff]
    %v30 = vld [vmem:[%s1] sm:$0xff]
    %v31 = vld [vmem:[%s1 + $0x8] sm:$0xff]
    %v32 = vld [vmem:[%s2] sm:$0xff]
    %v33 = vld [vmem:[%s2 + $0x8] sm:$0xff]
    %35 = vset.pattern.permute.xlu0 0
    %36 = vperm.xlu0 %35, %v32
    %v37 = vpop.permute.xlu0 %36
    %40 = vset.pattern.permute.xlu0 0
    %41 = vperm.xlu0 %40, %v33
    %v42 = vpop.permute.xlu0 %41
    %vm44 = vcmask 64512
    %v46 = vsel %vm44, %v30, 0
    %v49 = vsel %vm44, %v31, 0
    %v52 = vsel %vm44, %v29, 0
    %54 = vmatprep.subr.mxu0 0.0
    %55 = vmatpush1.xpose.msra.mxu0 0.0
    %56 = vmatprep.subr.mxu0 0.0
    %57 = vmatpush1.xpose.msra.mxu0 0.0
    %58 = vmatprep.subr.mxu0 0.0
    %59 = vmatpush1.xpose.msra.mxu0 0.0
    %60 = vmatprep.subr.mxu0 0.0
    %61 = vmatpush1.xpose.msra.mxu0 0.0
    %62 = vmatprep.subr.mxu0 0.0
    %63 = vmatpush1.xpose.msra.mxu0 0.0
    %64 = vmatprep.subr.mxu0 0.0
    %65 = vmatpush1.xpose.msra.mxu0 0.0
    %66 = vmatprep.subr.mxu0 0.0
    %67 = vmatpush1.xpose.msra.mxu0 0.0
    %68 = vmatprep.subr.mxu0 0.0
    %69 = vmatpush1.xpose.msra.mxu0 0.0
    %70 = vmatprep.subr.mxu0 0.0
    %71 = vmatpush1.xpose.msra.mxu0 0.0
    %72 = vmatprep.subr.mxu0 0.0
    %73 = vmatpush1.xpose.msra.mxu0 0.0
    %74 = vmatprep.subr.mxu0 0.0
    %75 = vmatpush1.xpose.msra.mxu0 0.0
    %76 = vmatprep.subr.mxu0 0.0
    %77 = vmatpush1.xpose.msra.mxu0 0.0
    %78 = vmatprep.subr.mxu0 0.0
    %79 = vmatpush1.xpose.msra.mxu0 0.0
    %80 = vmatprep.subr.mxu0 0.0
    %81 = vmatpush1.xpose.msra.mxu0 0.0
    %82 = vmatprep.subr.mxu0 0.0
    %83 = vmatpush1.xpose.msra.mxu0 0.0
    %84 = vmatprep.subr.mxu0 0.0
    %85 = vmatpush1.xpose.msra.mxu0 %v52
    %86 = vmatprep.subr.mxu0 0.0
    %87 = vmatpush2.xpose.msra.mxu0 0.0
    %88 = vmatprep.subr.mxu0 0.0
    %89 = vmatpush2.xpose.msra.mxu0 0.0
    %90 = vmatprep.subr.mxu0 0.0
    %91 = vmatpush2.xpose.msra.mxu0 0.0
    %92 = vmatprep.subr.mxu0 0.0
    %93 = vmatpush2.xpose.msra.mxu0 0.0
    %94 = vmatprep.subr.mxu0 0.0
    %95 = vmatpush2.xpose.msra.mxu0 0.0
    %96 = vmatprep.subr.mxu0 0.0
    %97 = vmatpush2.xpose.msra.mxu0 0.0
    %98 = vmatprep.subr.mxu0 0.0
    %99 = vmatpush2.xpose.msra.mxu0 0.0
    %100 = vmatprep.subr.mxu0 0.0
    %101 = vmatpush2.xpose.msra.mxu0 0.0
    %102 = vmatprep.subr.mxu0 0.0
    %103 = vmatpush2.xpose.msra.mxu0 0.0
    %104 = vmatprep.subr.mxu0 0.0
    %105 = vmatpush2.xpose.msra.mxu0 0.0
    %106 = vmatprep.subr.mxu0 0.0
    %107 = vmatpush2.xpose.msra.mxu0 0.0
    %108 = vmatprep.subr.mxu0 0.0
    %109 = vmatpush2.xpose.msra.mxu0 0.0
    %110 = vmatprep.subr.mxu0 0.0
    %111 = vmatpush2.xpose.msra.mxu0 0.0
    %112 = vmatprep.subr.mxu0 0.0
    %113 = vmatpush2.xpose.msra.mxu0 0.0
    %114 = vmatprep.subr.mxu0 0.0
    %115 = vmatpush2.xpose.msra.mxu0 0.0
    %116 = vmatprep.subr.mxu0 0.0
    %117 = vmatpush2.xpose.msra.mxu0 0.0
    %118 = vmatprep.mubr.f32.mxu0 0.0
    %119 = vmatmul.mubr.f32.gmra.mxu0 %v46
    %v120 = vpop.f32.mrf.mxu0
    %v121 = vadd.f32 %v37, %v120
    %v122 = vpop.f32.mrf.mxu0
    %123 = vmatprep.mubr.f32.mxu0 0.0
    %124 = vmatmul.mubr.f32.gmra.mxu0 %v49
    %v125 = vpop.f32.mrf.mxu0
    %v126 = vadd.f32 %v42, %v125
    %v127 = vpop.f32.mrf.mxu0
    %128 = vdwg.mxu0
    %v129 = vmax.f32 %v121, 0.0
    %v130 = vmax.f32 %v126, 0.0
    %v131 = vld [vmem:[%s3] sm:$0xff]
    %v132 = vld [vmem:[%s3 + $0x8] sm:$0xff]
    %v133 = vld [vmem:[%s4] sm:$0xff]
    %v134 = vld [vmem:[%s4 + $0x8] sm:$0xff]
    %136 = vset.pattern.permute.xlu0 0
    %137 = vperm.xlu0 %136, %v133
    %v138 = vpop.permute.xlu0 %137
    %141 = vset.pattern.permute.xlu0 0
    %142 = vperm.xlu0 %141, %v134
    %v143 = vpop.permute.xlu0 %142
    %vm145 = vcmask 130048
    %v147 = vsel %vm145, %v131, 0
    %v150 = vsel %vm145, %v132, 0
    %152 = vmatprep.subr.mxu0 0.0
    %153 = vmatpush1.msra.mxu0 0.0
    %154 = vmatprep.subr.mxu0 0.0
    %155 = vmatpush1.msra.mxu0 0.0
    %156 = vmatprep.subr.mxu0 0.0
    %157 = vmatpush1.msra.mxu0 0.0
    %158 = vmatprep.subr.mxu0 0.0
    %159 = vmatpush1.msra.mxu0 0.0
    %160 = vmatprep.subr.mxu0 0.0
    %161 = vmatpush1.msra.mxu0 0.0
    %162 = vmatprep.subr.mxu0 0.0
    %163 = vmatpush1.msra.mxu0 0.0
    %164 = vmatprep.subr.mxu0 0.0
    %165 = vmatpush1.msra.mxu0 0.0
    %166 = vmatprep.subr.mxu0 0.0
    %167 = vmatpush1.msra.mxu0 0.0
    %168 = vmatprep.subr.mxu0 0.0
    %169 = vmatpush1.msra.mxu0 0.0
    %170 = vmatprep.subr.mxu0 0.0
    %171 = vmatpush1.msra.mxu0 0.0
    %172 = vmatprep.subr.mxu0 0.0
    %173 = vmatpush1.msra.mxu0 0.0
    %174 = vmatprep.subr.mxu0 0.0
    %175 = vmatpush1.msra.mxu0 0.0
    %176 = vmatprep.subr.mxu0 0.0
    %177 = vmatpush1.msra.mxu0 0.0
    %178 = vmatprep.subr.mxu0 0.0
    %179 = vmatpush1.msra.mxu0 0.0
    %180 = vmatprep.subr.mxu0 0.0
    %181 = vmatpush1.msra.mxu0 %v130
    %182 = vmatprep.subr.mxu0 0.0
    %183 = vmatpush1.msra.mxu0 %v129
    %184 = vmatprep.subr.mxu0 0.0
    %185 = vmatpush2.msra.mxu0 0.0
    %186 = vmatprep.subr.mxu0 0.0
    %187 = vmatpush2.msra.mxu0 0.0
    %188 = vmatprep.subr.mxu0 0.0
    %189 = vmatpush2.msra.mxu0 0.0
    %190 = vmatprep.subr.mxu0 0.0
    %191 = vmatpush2.msra.mxu0 0.0
    %192 = vmatprep.subr.mxu0 0.0
    %193 = vmatpush2.msra.mxu0 0.0
    %194 = vmatprep.subr.mxu0 0.0
    %195 = vmatpush2.msra.mxu0 0.0
    %196 = vmatprep.subr.mxu0 0.0
    %197 = vmatpush2.msra.mxu0 0.0
    %198 = vmatprep.subr.mxu0 0.0
    %199 = vmatpush2.msra.mxu0 0.0
    %200 = vmatprep.subr.mxu0 0.0
    %201 = vmatpush2.msra.mxu0 0.0
    %202 = vmatprep.subr.mxu0 0.0
    %203 = vmatpush2.msra.mxu0 0.0
    %204 = vmatprep.subr.mxu0 0.0
    %205 = vmatpush2.msra.mxu0 0.0
    %206 = vmatprep.subr.mxu0 0.0
    %207 = vmatpush2.msra.mxu0 0.0
    %208 = vmatprep.subr.mxu0 0.0
    %209 = vmatpush2.msra.mxu0 0.0
    %210 = vmatprep.subr.mxu0 0.0
    %211 = vmatpush2.msra.mxu0 0.0
    %212 = vmatprep.subr.mxu0 0.0
    %213 = vmatpush2.msra.mxu0 0.0
    %214 = vmatprep.subr.mxu0 0.0
    %215 = vmatpush2.msra.mxu0 0.0
    %216 = vmatprep.mubr.f32.mxu0 0.0
    %217 = vmatmul.mubr.f32.gmra.mxu0 %v147
    %v218 = vpop.f32.mrf.mxu0
    %v219 = vadd.f32 %v138, %v218
    %v220 = vpop.f32.mrf.mxu0
    %221 = vmatprep.mubr.f32.mxu0 0.0
    %222 = vmatmul.mubr.f32.gmra.mxu0 %v150
    %v223 = vpop.f32.mrf.mxu0
    %v224 = vadd.f32 %v143, %v223
    %v225 = vpop.f32.mrf.mxu0
    %226 = vdwg.mxu0
    %v227 = vmax.f32 %v219, 0.0
    %v228 = vmax.f32 %v224, 0.0
    %v229 = vld [vmem:[%s5] sm:$0xff]
    %v230 = vld [vmem:[%s5 + $0x8] sm:$0xff]
    %232 = vset.pattern.permute.xlu0 0
    %233 = vperm.xlu0 %232, %v229
    %v234 = vpop.permute.xlu0 %233
    %237 = vset.pattern.permute.xlu0 0
    %238 = vperm.xlu0 %237, %v230
    %v239 = vpop.permute.xlu0 %238
    %v241 = vmul.f32 %v227, %v234
    %v242 = vmul.f32 %v228, %v239
    %v243 = vsel %vm44, %v241, 0.0
    %v244 = vsel %vm44, %v242, 0.0
    %v245 = vadd.f32 %v243, %v244
    %v246 = vrot.slane %v245, 4
    %v247 = vadd.f32 %v245, %v246
    %v248 = vrot.slane %v247, 2
    %v249 = vadd.f32 %v247, %v248
    %v250 = vrot.slane %v249, 1
    %v251 = vadd.f32 %v249, %v250
    %v252 = vld [vmem:[#allocation2] sm:$0x1]
    %254 = vset.pattern.permute.xlu0 0
    %255 = vperm.xlu0 %254, %v252
    %v256 = vpop.permute.xlu0 %255
    %v258 = vlaneseq
    %v259 = vshrl.u32 %v258, 7
    %v260 = vsub.s32 0, %v259
    %v261 = vrot.slane %v256, %v260
    %v262 = vadd.f32 %v251, %v261
    %vm263 = vcmask 57344
    %264 = vst.msk [vmem:[#allocation3] sm:$0x1] %vm263, %v262
    // Predicated region
    $region30: #{tpu_custom_call.1} parent=1 // pred_check
      _
    $region31: #{tpu_custom_call.1} parent=1 // pred_check_branch
      %266 = sbr.rel (0) target = $region33
    $region32: #{tpu_custom_call.1} parent=1 // pred_region
      %s268 = ssub.s32 16, 16
      %269 = vsyncadd [#allocation4], %s268
      %s271 = sshll.u32 [#allocation3], 4
      %s272 = int_to_ptr.vmem [resolvable:$true] %s271
      %274 = dma.vmem_to_hbm [thread:$0]  %s272, 16, %s7, [#allocation4]
    $region33: #{tpu_custom_call.1} parent=1 // pred_fallthru
      _
    // Predicated region
    $region34: #{tpu_custom_call.1} parent=1 // pred_check
      _
    $region35: #{tpu_custom_call.1} parent=1 // pred_check_branch
      %276 = sbr.rel (0) target = $region37
    $region36: #{tpu_custom_call.1} parent=1 // pred_region
      %277 = dma.done [#allocation4], 16
    $region37: #{tpu_custom_call.1} parent=1 // pred_fallthru
      _
    %278 = vsyncpa [#allocation4], 1

</llo_original>
